<compile_context>
chip_gen: v7x
topology: tpu7x:2x2x1
jax: 0.10.0
libtpu: 0.0.40
codegen_flags: <defaults>
</compile_context>

<pallas_src>
import functools

import jax
import jax.numpy as jnp
from jax.experimental import pallas as pl
from jax.experimental.pallas import tpu as pltpu


def _round_up(x, m):
    return ((x + m - 1) // m) * m


# ----------------------------------------------------------------------------
# Capability probes (single-buffered constant blocks, VMEM budget)
# ----------------------------------------------------------------------------
_SINGLE_BUFFER_OK = None


def _probe_kernel(x_ref, o_ref):
    o_ref[...] = x_ref[...] + 1.0


def _single_buffer_supported():
    """Probe whether pipeline_mode=pl.Buffered(1) lowers on this JAX/TPU."""
    global _SINGLE_BUFFER_OK
    if _SINGLE_BUFFER_OK is None:
        try:
            spec = pl.BlockSpec((8, 128), lambda i: (0, 0),
                                pipeline_mode=pl.Buffered(1))
            x = jnp.zeros((8, 128), jnp.float32)
            out = pl.pallas_call(
                _probe_kernel,
                out_shape=jax.ShapeDtypeStruct((16, 128), jnp.float32),
                grid=(2,),
                in_specs=[spec],
                out_specs=pl.BlockSpec((8, 128), lambda i: (i, 0)),
            )(x)
            jax.block_until_ready(out)
            _SINGLE_BUFFER_OK = True
        except Exception:
            _SINGLE_BUFFER_OK = False
    return _SINGLE_BUFFER_OK


def _const_spec(block_shape, index_map):
    """BlockSpec for a grid-constant operand; single-buffer when possible."""
    if _single_buffer_supported():
        return pl.BlockSpec(block_shape, index_map,
                            pipeline_mode=pl.Buffered(1))
    return pl.BlockSpec(block_shape, index_map)


def _vmem_budget_bytes():
    """Usable VMEM budget (~75% of physical) for this TPU generation."""
    cap = None
    try:
        info = pltpu.get_tpu_info()
        for attr in ("vmem_capacity_bytes", "vmem_size_bytes", "vmem_bytes"):
            v = getattr(info, attr, None)
            if v:
                cap = int(v)
                break
    except Exception:
        cap = None
    if cap is None:
        try:
            kind = jax.devices()[0].device_kind.lower()
        except Exception:
            kind = ""
        # v5e / v6e: 128 MiB physical; v7x and unknown: conservative 64 MiB.
        cap = 128 * 1024 * 1024 if ("v5" in kind or "v6" in kind) \
            else 64 * 1024 * 1024
    return int(cap * 3 // 4)   # ~25% headroom for compiler scratch


# ----------------------------------------------------------------------------
# Kernels
# ----------------------------------------------------------------------------
def _feature_kernel(h_ref, w_ref, z_ref):
    # Z_0 = h @ W'_0  (BN folded into W'); only used for layer 0.
    z = jnp.dot(h_ref[...].astype(jnp.bfloat16), w_ref[...],
                preferred_element_type=jnp.float32)
    z_ref[...] = z.astype(jnp.bfloat16)


def _aggregate_kernel(*refs, has_l2norm, skip, fuse_next, dp):
    # K-tiled:  acc += A[i, k] @ Z[k]; epilogue at k == last:
    #   m = relu(acc + b'), optional L2 norm, then either
    #     * fuse_next: emit z_next = m(bf16) @ W_{l+1}   (intermediate layers)
    #     * skip=sum : emit relu(m + h0)                  (last layer, skipsum)
    #     * skip=cat : emit [relu(h0) | relu(m)]          (last layer, skipconcat)
    idx = 0
    a_ref = refs[idx]; idx += 1
    z_ref = refs[idx]; idx += 1
    b_ref = refs[idx]; idx += 1
    wn_ref = None
    h0_ref = None
    if fuse_next:
        wn_ref = refs[idx]; idx += 1
    if skip != "none":
        h0_ref = refs[idx]; idx += 1
    o_ref = refs[idx]; idx += 1
    acc_ref = refs[idx]

    k = pl.program_id(1)

    @pl.when(k == 0)
    def _():
        acc_ref[...] = jnp.zeros_like(acc_ref)

    acc_ref[...] += jnp.dot(a_ref[...], z_ref[...],
                            preferred_element_type=jnp.float32)

    @pl.when(k == pl.num_programs(1) - 1)
    def _():
        m = acc_ref[...] + b_ref[...]
        # TODO(synk): dropout is identity in eval mode (training RNG omitted).
        m = jnp.maximum(m, 0.0)                                   # act (ReLU)
        if has_l2norm:
            # F.normalize(p=2, dim=1): rsqrt rides the EUP slot (no VALU divide)
            m = m * jax.lax.rsqrt(
                jnp.maximum(jnp.sum(m * m, axis=-1, keepdims=True), 1e-24))

        if skip == "none":
            if fuse_next:
                zn = jnp.dot(m.astype(jnp.bfloat16), wn_ref[...],
                             preferred_element_type=jnp.float32)
                o_ref[...] = zn.astype(jnp.bfloat16)
            else:
                o_ref[...] = m.astype(o_ref.dtype)
        elif skip == "sum":
            o_ref[...] = jnp.maximum(m + h0_ref[...], 0.0)        # act(h + h_0)
        else:  # concat: [ act(h_0) | act(layer out) ] in one lane-dense buffer
            o_ref[:, :dp] = jnp.maximum(h0_ref[...], 0.0)
            o_ref[:, dp:] = jnp.maximum(m, 0.0)


def _fused_block_kernel(a_ref, h_ref, w_ref, b_ref, o_ref, *,
                        num_layers, has_l2norm, skip, dp):
    # Whole skip-block (all layers + skip + act) in one kernel, fully VMEM
    # resident.  Used whenever the graph fits the generation-aware budget.
    a = a_ref[...]          # (Np, Np) bf16
    h0 = h_ref[...]         # (Np, dp) f32
    h = h0
    for l in range(num_layers):
        z = jnp.dot(h.astype(jnp.bfloat16), w_ref[l],
                    preferred_element_type=jnp.float32)
        m = jnp.dot(a, z.astype(jnp.bfloat16),
                    preferred_element_type=jnp.float32) + b_ref[l]
        m = jnp.maximum(m, 0.0)
        if has_l2norm:
            m = m * jax.lax.rsqrt(
                jnp.maximum(jnp.sum(m * m, axis=-1, keepdims=True), 1e-24))
        h = m

    if skip == "sum":
        o_ref[...] = jnp.maximum(h + h0, 0.0)
    else:  # concat
        o_ref[:, :dp] = jnp.maximum(h0, 0.0)
        o_ref[:, dp:] = jnp.maximum(h, 0.0)


# ----------------------------------------------------------------------------
# pallas_call wrappers
# ----------------------------------------------------------------------------
def feature_transform(h, w, *, tile_n, vmem_limit):
    """Z_0 = h @ W'_0  (bf16 out), tiled over node rows (layer 0 only)."""
    np_, dp = h.shape
    return pl.pallas_call(
        _feature_kernel,
        out_shape=jax.ShapeDtypeStruct((np_, dp), jnp.bfloat16),
        grid=(pl.cdiv(np_, tile_n),),
        in_specs=[
            pl.BlockSpec((tile_n, dp), lambda i: (i, 0)),   # h row tile
            _const_spec((dp, dp), lambda i: (0, 0)),        # full W' (bf16)
        ],
        out_specs=pl.BlockSpec((tile_n, dp), lambda i: (i, 0)),
        compiler_params=pltpu.CompilerParams(
            dimension_semantics=("parallel",),
            vmem_limit_bytes=vmem_limit),
    )(h, w)


def aggregate(a16, z, b, wn=None, h0=None, *, tile_n, tile_k,
              has_l2norm, skip, vmem_limit):
    """out = epilogue(A @ Z + b'), K-tiled with a VMEM f32 accumulator.

    Intermediate layers (skip="none", wn given) emit the next layer's bf16
    feature transform; the last layer fuses the block skip + final ReLU.
    """
    np_ = a16.shape[0]
    dp = z.shape[1]
    assert np_ % tile_k == 0, "K padding must make tile_k divide N exactly"
    fuse_next = wn is not None

    kernel = functools.partial(_aggregate_kernel, has_l2norm=has_l2norm,
                               skip=skip, fuse_next=fuse_next, dp=dp)

    in_specs = [
        pl.BlockSpec((tile_n, tile_k), lambda i, k: (i, k)),   # A tile (bf16)
        pl.BlockSpec((tile_k, dp), lambda i, k: (k, 0)),       # Z K-slab (bf16)
        _const_spec((1, dp), lambda i, k: (0, 0)),             # folded bias f32
    ]
    inputs = [a16, z, b]
    if fuse_next:
        in_specs.append(_const_spec((dp, dp), lambda i, k: (0, 0)))  # W_{l+1}
        inputs.append(wn)
    if skip != "none":
        in_specs.append(pl.BlockSpec((tile_n, dp), lambda i, k: (i, 0)))  # h0
        inputs.append(h0)

    if skip == "concat":
        out_w, out_dtype = 2 * dp, jnp.float32
    elif skip == "sum":
        out_w, out_dtype = dp, jnp.float32
    else:
        out_w = dp
        out_dtype = jnp.bfloat16 if fuse_next else jnp.float32

    return pl.pallas_call(
        kernel,
        out_shape=jax.ShapeDtypeStruct((np_, out_w), out_dtype),
        grid=(pl.cdiv(np_, tile_n), np_ // tile_k),
        in_specs=in_specs,
        out_specs=pl.BlockSpec((tile_n, out_w), lambda i, k: (i, 0)),
        scratch_shapes=[pltpu.VMEM((tile_n, dp), jnp.float32)],
        compiler_params=pltpu.CompilerParams(
            dimension_semantics=("parallel", "arbitrary"),
            vmem_limit_bytes=vmem_limit),
    )(*inputs)


def fused_block(a16, h_pad, w_stack, b_stack, *, has_l2norm, skip, dp,
                vmem_limit):
    """Whole block in one pallas_call; all operands fully resident in VMEM."""
    np_ = a16.shape[0]
    num_layers = w_stack.shape[0]
    kernel = functools.partial(_fused_block_kernel, num_layers=num_layers,
                               has_l2norm=has_l2norm, skip=skip, dp=dp)
    out_w = 2 * dp if skip == "concat" else dp
    return pl.pallas_call(
        kernel,
        out_shape=jax.ShapeDtypeStruct((np_, out_w), jnp.float32),
        compiler_params=pltpu.CompilerParams(vmem_limit_bytes=vmem_limit),
    )(a16, h_pad, w_stack, b_stack)


# ----------------------------------------------------------------------------
# GNNSkipBlock module (parameter setup / padding is plain-JAX glue)
# ----------------------------------------------------------------------------
class GNNSkipBlockPallas:
    def __init__(self, dim_in, dim_out, num_layers, stage_type,
                 has_bn, has_l2norm, key):
        if stage_type == "skipsum":
            assert dim_in == dim_out, "Sum skip must have same dim_in, dim_out"
        elif stage_type != "skipconcat":
            raise ValueError("stage_type must in [skipsum, skipconcat]")
        self.stage_type = stage_type
        self.has_l2norm = has_l2norm
        self.dim_in = dim_in
        self.dim_out = dim_out
        self._vmem_budget = _vmem_budget_bytes()

        # Layer in/out dims, mirroring the PyTorch __init__ exactly.
        dims = []
        if num_layers == 1:
            dims.append((dim_in, dim_out))
        else:
            for i in range(num_layers - 1):
                dims.append((dim_in if i == 0 else dim_out, dim_out))
            dims.append((dim_out, dim_out))
        self.num_layers = len(dims)

        # Uniform lane-padded feature width (dense, unmasked vector stores).
        self.dp = _round_up(max(dim_in, dim_out), 128)

        w_list, b_list = [], []
        self.ref_params = []          # unpadded f32 (for the pure-JAX reference)
        for (d_in, d_out) in dims:
            key, kw = jax.random.split(key)
            scale = (2.0 / (d_in + d_out)) ** 0.5   # glorot-ish, deterministic
            w = scale * jax.random.normal(kw, (d_in, d_out), jnp.float32)
            b = jnp.zeros((d_out,), jnp.float32)
            if has_bn:
                # eval-mode BN: gamma=1, beta=0, mean=0, var=1, eps=1e-5
                gamma = jnp.ones((d_out,), jnp.float32)
                beta = jnp.zeros((d_out,), jnp.float32)
                mean = jnp.zeros((d_out,), jnp.float32)
                var = jnp.ones((d_out,), jnp.float32)
                s = gamma * jax.lax.rsqrt(var + 1e-5)
                t = beta - mean * s
            else:
                s = jnp.ones((d_out,), jnp.float32)
                t = jnp.zeros((d_out,), jnp.float32)
            # Fold BN + bias into the weights: W' = W*s, b' = b*s + t
            w_f = w * s[None, :]
            b_f = b * s + t
            self.ref_params.append((w_f, b_f))

            wp = jnp.zeros((self.dp, self.dp), jnp.float32)
            wp = wp.at[:d_in, :d_out].set(w_f)
            bp = jnp.zeros((1, self.dp), jnp.float32)
            bp = bp.at[0, :d_out].set(b_f)
            w_list.append(wp.astype(jnp.bfloat16))   # MXU operand dtype
            b_list.append(bp)                         # epilogue stays f32
        self.w_list = w_list
        self.b_list = b_list
        self.w_stack = jnp.stack(w_list)              # (L, dp, dp) bf16
        self.b_stack = jnp.stack(b_list)              # (L, 1, dp)  f32

    def _fused_vmem_bytes(self, np_, skip_mode):
        dp, L = self.dp, self.num_layers
        out_w = 2 * dp if skip_mode == "concat" else dp
        est = (np_ * np_ * 2                 # A bf16
               + np_ * dp * 4                # h f32
               + L * dp * dp * 2             # stacked W' bf16
               + L * dp * 4                  # stacked bias
               + np_ * out_w * 4             # output f32
               + np_ * dp * (4 + 4 + 2))     # per-layer temporaries (z/m)
        return int(est * 13 // 10)           # 30% margin for Mosaic scratch

    def __call__(self, a_norm, h, *, tile_n=None, tile_k=None,
                 force_tiled=False):
        n, d = h.shape
        assert d == self.dim_in and a_norm.shape == (n, n)
        dp = self.dp
        skip_mode = "sum" if self.stage_type == "skipsum" else "concat"
        budget = self._vmem_budget

        # K tile: multiple of 128; pad N (rows + cols, zeros) so it divides
        # exactly.  Padded A rows/cols are zero, so the K-tiled accumulation
        # stays exact; padded output rows are sliced off at the end.
        if tile_k is None:
            tile_k = 512
        tile_k = min(_round_up(tile_k, 128), _round_up(n, 128))
        np_ = _round_up(n, tile_k)

        # Cast A once to bf16 and pad (fused by XLA into a single pass).
        a16 = jnp.pad(a_norm.astype(jnp.bfloat16),
                      ((0, np_ - n), (0, np_ - n)))
        h_pad = jnp.pad(h.astype(jnp.float32),
                        ((0, np_ - n), (0, dp - self.dim_in)))

        use_fused = (not force_tiled) and \
            self._fused_vmem_bytes(np_, skip_mode) <= budget

        if use_fused:
            res = fused_block(a16, h_pad, self.w_stack, self.b_stack,
                              has_l2norm=self.has_l2norm, skip=skip_mode,
                              dp=dp, vmem_limit=budget)
        else:
            if tile_n is None:
                # HBM-roofline knee is ~512; 1024 for very large graphs
                # (prefer 512 on v5e — lower bandwidth / tighter VMEM).
                tile_n = 512 if np_ <= 8192 else 1024
            tile_n = min(int(tile_n), np_)
            tile_n = max(8, (tile_n // 8) * 8)

            # Layer 0 feature transform: standalone, with its own large tile.
            z = feature_transform(h_pad, self.w_list[0],
                                  tile_n=min(2048, np_), vmem_limit=budget)
            res = None
            for l in range(self.num_layers):
                last = (l == self.num_layers - 1)
                if not last:
                    # Intermediate layer: aggregate + fused next feature
                    # transform (emits bf16 Z_{l+1} directly).
                    z = aggregate(a16, z, self.b_list[l],
                                  wn=self.w_list[l + 1],
                                  tile_n=tile_n, tile_k=tile_k,
                                  has_l2norm=self.has_l2norm, skip="none",
                                  vmem_limit=budget)
                else:
                    res = aggregate(a16, z, self.b_list[l], h0=h_pad,
                                    tile_n=tile_n, tile_k=tile_k,
                                    has_l2norm=self.has_l2norm,
                                    skip=skip_mode, vmem_limit=budget)

        if self.stage_type == "skipsum":
            return res[:n, :self.dim_out]
        # skipconcat: result buffer is [ act(h_0) | act(h_final) ], each half
        # dp lanes wide.  Host-side work only strips the lane/row padding.
        if self.dim_in == dp and self.dim_out == dp and n == np_:
            return res
        return jnp.concatenate(
            [res[:n, :self.dim_in], res[:n, dp:dp + self.dim_out]], axis=1)


# ----------------------------------------------------------------------------
# Pure-JAX f32 reference (eval-mode semantics of the PyTorch module)
# ----------------------------------------------------------------------------
def reference_forward(block, a, h):
    h0 = h
    x = h
    for (w, b) in block.ref_params:
        m = a @ (x @ w) + b
        m = jnp.maximum(m, 0.0)
        if block.has_l2norm:
            nrm = jnp.sqrt(jnp.sum(m * m, axis=-1, keepdims=True))
            m = m / jnp.maximum(nrm, 1e-12)
        x = m
    if block.stage_type == "skipsum":
        out = x + h0
    else:
        out = jnp.concatenate([h0, x], axis=1)
    return jnp.maximum(out, 0.0)


# ----------------------------------------------------------------------------
# Demo
# ----------------------------------------------------------------------------
if __name__ == "__main__":
    key = jax.random.PRNGKey(0)
    k_adj, k_h, k_hc, k_p1, k_p2 = jax.random.split(key, 5)

    N = 72            # deliberately not a multiple of 128 (exercises padding)
    DIM = 32

    # Dense symmetrically-normalized adjacency A_norm = D^{-1/2}(A+I)D^{-1/2}
    adj = (jax.random.uniform(k_adj, (N, N)) < 0.15).astype(jnp.float32)
    adj = jnp.maximum(adj, adj.T)
    adj = jnp.maximum(adj, jnp.eye(N, dtype=jnp.float32))
    deg = jnp.sum(adj, axis=1)
    d_inv_sqrt = 1.0 / jnp.sqrt(deg)
    a_norm = adj * d_inv_sqrt[:, None] * d_inv_sqrt[None, :]

    # ---- skipsum block (2 layers, BN + L2 norm) ---------------------------
    h = jax.random.normal(k_h, (N, DIM), jnp.float32)
    blk_sum = GNNSkipBlockPallas(DIM, DIM, 2, "skipsum",
                                 has_bn=True, has_l2norm=True, key=k_p1)
    out_fused = jax.block_until_ready(blk_sum(a_norm, h))            # fused path
    out_tiled = jax.block_until_ready(
        blk_sum(a_norm, h, force_tiled=True, tile_n=32))             # tiled path
    ref = reference_forward(blk_sum, a_norm, h)
    assert out_fused.shape == (N, DIM) and out_tiled.shape == (N, DIM)
    assert bool(jnp.all(jnp.isfinite(out_fused)))
    assert bool(jnp.all(jnp.isfinite(out_tiled)))
    assert float(jnp.max(jnp.abs(out_fused - ref))) < 7.5e-2
    assert float(jnp.max(jnp.abs(out_tiled - ref))) < 7.5e-2

    # ---- skipconcat block (3 layers, dim_in != dim_out, no BN / no L2) ----
    DIM_IN_C = 24
    h_c = jax.random.normal(k_hc, (N, DIM_IN_C), jnp.float32)
    blk_cat = GNNSkipBlockPallas(DIM_IN_C, DIM, 3, "skipconcat",
                                 has_bn=False, has_l2norm=False, key=k_p2)
    out_c_fused = jax.block_until_ready(blk_cat(a_norm, h_c))
    out_c_tiled = jax.block_until_ready(
        blk_cat(a_norm, h_c, force_tiled=True))                      # default tiles
    ref_c = reference_forward(blk_cat, a_norm, h_c)
    assert out_c_fused.shape == (N, DIM_IN_C + DIM)
    assert out_c_tiled.shape == (N, DIM_IN_C + DIM)
    assert bool(jnp.all(jnp.isfinite(out_c_fused)))
    assert bool(jnp.all(jnp.isfinite(out_c_tiled)))
    assert float(jnp.max(jnp.abs(out_c_fused - ref_c))) < 7.5e-2
    assert float(jnp.max(jnp.abs(out_c_tiled - ref_c))) < 7.5e-2

    print("KERNEL_OK")
</pallas_src>

<mosaic_0001>
module attributes {stable_mosaic.version = 11 : i64} {
  func.func @_fused_block_kernel(%arg0: memref<128x128xbf16, #tpu.memory_space<vmem>>, %arg1: memref<128x128xf32, #tpu.memory_space<vmem>>, %arg2: memref<2x128x128xbf16, #tpu.memory_space<vmem>>, %arg3: memref<2x1x128xf32, #tpu.memory_space<vmem>>, %arg4: memref<128x128xf32, #tpu.memory_space<vmem>>) attributes {dimension_semantics = [], scalar_prefetch = 0 : i64, scratch_operands = 0 : i64, tpu.core_type = #tpu.core_type<tc>} {
    %c0 = arith.constant 0 : index
    %c0_0 = arith.constant 0 : index
    %0 = vector.load %arg0[%c0, %c0_0] : memref<128x128xbf16, #tpu.memory_space<vmem>>, vector<128x128xbf16>
    %c0_1 = arith.constant 0 : index
    %c0_2 = arith.constant 0 : index
    %1 = vector.load %arg1[%c0_1, %c0_2] : memref<128x128xf32, #tpu.memory_space<vmem>>, vector<128x128xf32>
    %2 = arith.truncf %1 : vector<128x128xf32> to vector<128x128xbf16>
    %c0_3 = arith.constant 0 : index
    %c0_4 = arith.constant 0 : index
    %c0_5 = arith.constant 0 : index
    %3 = vector.load %arg2[%c0_3, %c0_4, %c0_5] : memref<2x128x128xbf16, #tpu.memory_space<vmem>>, vector<1x128x128xbf16>
    %4 = vector.shape_cast %3 : vector<1x128x128xbf16> to vector<128x128xbf16>
    %cst = arith.constant dense<0.000000e+00> : vector<128x128xf32>
    %5 = tpu.matmul %2, %4, %cst {dimension_numbers = #tpu.dot_dimension_numbers<[1], [0], [0], [1], [0, 0, 1, 1], [], []>} : vector<128x128xbf16>, vector<128x128xbf16>, vector<128x128xf32> -> vector<128x128xf32>
    %6 = arith.truncf %5 : vector<128x128xf32> to vector<128x128xbf16>
    %cst_6 = arith.constant dense<0.000000e+00> : vector<128x128xf32>
    %7 = tpu.matmul %0, %6, %cst_6 {dimension_numbers = #tpu.dot_dimension_numbers<[1], [0], [0], [1], [0, 0, 1, 1], [], []>} : vector<128x128xbf16>, vector<128x128xbf16>, vector<128x128xf32> -> vector<128x128xf32>
    %c0_7 = arith.constant 0 : index
    %c0_8 = arith.constant 0 : index
    %c0_9 = arith.constant 0 : index
    %8 = vector.load %arg3[%c0_7, %c0_8, %c0_9] : memref<2x1x128xf32, #tpu.memory_space<vmem>>, vector<1x1x128xf32>
    %9 = vector.shape_cast %8 : vector<1x1x128xf32> to vector<1x128xf32>
    %10 = vector.broadcast %9 : vector<1x128xf32> to vector<128x128xf32>
    %11 = arith.addf %7, %10 : vector<128x128xf32>
    %cst_10 = arith.constant 0.000000e+00 : f32
    %12 = vector.broadcast %cst_10 : f32 to vector<128x128xf32>
    %13 = arith.maximumf %11, %12 : vector<128x128xf32>
    %14 = arith.mulf %13, %13 : vector<128x128xf32>
    %cst_11 = arith.constant dense<0.000000e+00> : vector<128xf32>
    %15 = vector.multi_reduction <add>, %14, %cst_11 [1] : vector<128x128xf32> to vector<128xf32>
    %16 = vector.shape_cast %15 : vector<128xf32> to vector<128x1xf32>
    %cst_12 = arith.constant 1.000000e-24 : f32
    %17 = vector.broadcast %cst_12 : f32 to vector<128x1xf32>
    %18 = arith.maximumf %16, %17 : vector<128x1xf32>
    %19 = math.rsqrt %18 : vector<128x1xf32>
    %20 = vector.broadcast %19 : vector<128x1xf32> to vector<128x128xf32>
    %21 = arith.mulf %13, %20 : vector<128x128xf32>
    %22 = arith.truncf %21 : vector<128x128xf32> to vector<128x128xbf16>
    %c1 = arith.constant 1 : index
    %c0_13 = arith.constant 0 : index
    %c0_14 = arith.constant 0 : index
    %23 = vector.load %arg2[%c1, %c0_13, %c0_14] : memref<2x128x128xbf16, #tpu.memory_space<vmem>>, vector<1x128x128xbf16>
    %24 = vector.shape_cast %23 : vector<1x128x128xbf16> to vector<128x128xbf16>
    %cst_15 = arith.constant dense<0.000000e+00> : vector<128x128xf32>
    %25 = tpu.matmul %22, %24, %cst_15 {dimension_numbers = #tpu.dot_dimension_numbers<[1], [0], [0], [1], [0, 0, 1, 1], [], []>} : vector<128x128xbf16>, vector<128x128xbf16>, vector<128x128xf32> -> vector<128x128xf32>
    %26 = arith.truncf %25 : vector<128x128xf32> to vector<128x128xbf16>
    %cst_16 = arith.constant dense<0.000000e+00> : vector<128x128xf32>
    %27 = tpu.matmul %0, %26, %cst_16 {dimension_numbers = #tpu.dot_dimension_numbers<[1], [0], [0], [1], [0, 0, 1, 1], [], []>} : vector<128x128xbf16>, vector<128x128xbf16>, vector<128x128xf32> -> vector<128x128xf32>
    %c1_17 = arith.constant 1 : index
    %c0_18 = arith.constant 0 : index
    %c0_19 = arith.constant 0 : index
    %28 = vector.load %arg3[%c1_17, %c0_18, %c0_19] : memref<2x1x128xf32, #tpu.memory_space<vmem>>, vector<1x1x128xf32>
    %29 = vector.shape_cast %28 : vector<1x1x128xf32> to vector<1x128xf32>
    %30 = vector.broadcast %29 : vector<1x128xf32> to vector<128x128xf32>
    %31 = arith.addf %27, %30 : vector<128x128xf32>
    %cst_20 = arith.constant 0.000000e+00 : f32
    %32 = vector.broadcast %cst_20 : f32 to vector<128x128xf32>
    %33 = arith.maximumf %31, %32 : vector<128x128xf32>
    %34 = arith.mulf %33, %33 : vector<128x128xf32>
    %cst_21 = arith.constant dense<0.000000e+00> : vector<128xf32>
    %35 = vector.multi_reduction <add>, %34, %cst_21 [1] : vector<128x128xf32> to vector<128xf32>
    %36 = vector.shape_cast %35 : vector<128xf32> to vector<128x1xf32>
    %cst_22 = arith.constant 1.000000e-24 : f32
    %37 = vector.broadcast %cst_22 : f32 to vector<128x1xf32>
    %38 = arith.maximumf %36, %37 : vector<128x1xf32>
    %39 = math.rsqrt %38 : vector<128x1xf32>
    %40 = vector.broadcast %39 : vector<128x1xf32> to vector<128x128xf32>
    %41 = arith.mulf %33, %40 : vector<128x128xf32>
    %42 = arith.addf %41, %1 : vector<128x128xf32>
    %cst_23 = arith.constant 0.000000e+00 : f32
    %43 = vector.broadcast %cst_23 : f32 to vector<128x128xf32>
    %44 = arith.maximumf %42, %43 : vector<128x128xf32>
    %c0_24 = arith.constant 0 : index
    %c0_25 = arith.constant 0 : index
    %45 = vector.load %arg4[%c0_24, %c0_25] : memref<128x128xf32, #tpu.memory_space<vmem>>, vector<128x128xf32>
    tpu.vector_store %arg4[%c0_24, %c0_25], %44 {strides = array<i32>} : memref<128x128xf32, #tpu.memory_space<vmem>>, vector<128x128xf32>,
    return
  }
}

</mosaic_0001>

<llo_original>
// kernel: tpu_custom_call.1
$region0: #{tpu_custom_call.1}
  #allocation0 [shape = 'u32[]', space=smem, size = 0x4, offset = 0x4, fixed_abs, tag = 'smem constant byte address 0x4 - core index']
  #allocation1 [shape = 'u32[144,128]{1,0:T(1,128)}', space=vmem, size = 0x12000, scoped, tag = 'internal scratch']
  %s0 = inlined_call_operand.hbm [shape: bf16[128,128], index: 0, kind: input, shape index: {}]
  %s1 = inlined_call_operand.hbm [shape: f32[128,128], index: 1, kind: input, shape index: {}]
  %s2 = inlined_call_operand.hbm [shape: bf16[2,128,128], index: 2, kind: input, shape index: {}]
  %s3 = inlined_call_operand.vmem [shape: f32[2,1,128], index: 3, kind: input, shape index: {}]
  %s4 = inlined_call_operand.hbm [shape: f32[128,128], index: 4, kind: output, shape index: {}]
  %s5 = sld [smem:[#allocation0]]
  $region38: #{tpu_custom_call.1} parent=0
    _
  %s7 = ssub.s32 1, %s5
  %s8 = scalar_select 0, %s7, %s5
  $region1: #{tpu_custom_call.1} parent=0
    #allocation2 [shape = 'u8[32768]{0}', space=vmem, size = 0x8000, scoped, tag = 'input window, operand 0, single buffered']
    #allocation3 [shape = 's32[1]{0}', space=sflag, size = 0x4, scoped, tag = 'scoped memory for tpu_custom_call.1']
    #allocation4 [shape = 's32[1]{0}', space=sflag, size = 0x4, scoped, tag = 'scoped memory for tpu_custom_call.1']
    #allocation5 [shape = 'u8[65536]{0}', space=vmem, size = 0x10000, scoped, tag = 'input window, operand 1, single buffered']
    #allocation6 [shape = 's32[1]{0}', space=sflag, size = 0x4, scoped, tag = 'scoped memory for tpu_custom_call.1']
    #allocation7 [shape = 'u8[65536]{0}', space=vmem, size = 0x10000, scoped, tag = 'input window, operand 2, single buffered']
    #allocation8 [shape = 'u8[65536]{0}', space=vmem, size = 0x10000, scoped, tag = 'output window, operand 0, single buffered']
    %9 = vsyncpa [#allocation3], 0
    %10 = vsyncpa [#allocation6], 0
    %11 = vsyncpa [#allocation4], 0
    // Predicated region
    $region2: #{tpu_custom_call.1} parent=1 // pred_check
      _
    $region3: #{tpu_custom_call.1} parent=1 // pred_check_branch
      %13 = sbr.rel (0) target = $region5
    $region4: #{tpu_custom_call.1} parent=1 // pred_region
      %s15 = ssub.s32 1024, 1024
      %16 = vsyncadd [#allocation3], %s15
      %s17 = sshll.u32 [#allocation2], 4
      %s18 = int_to_ptr.vmem [resolvable:$true] %s17
      %23 = dma.hbm_to_vmem [thread:$0]  %s0, 1024, %s18, [#allocation3], 64, 64, 4
    $region5: #{tpu_custom_call.1} parent=1 // pred_fallthru
      _
    // Predicated region
    $region6: #{tpu_custom_call.1} parent=1 // pred_check
      _
    $region7: #{tpu_custom_call.1} parent=1 // pred_check_branch
      %25 = sbr.rel (0) target = $region9
    $region8: #{tpu_custom_call.1} parent=1 // pred_region
      %s27 = ssub.s32 2048, 2048
      %28 = vsyncadd [#allocation6], %s27
      %s29 = sshll.u32 [#allocation5], 4
      %s30 = int_to_ptr.vmem [resolvable:$true] %s29
      %35 = dma.hbm_to_vmem [thread:$0]  %s1, 2048, %s30, [#allocation6], 128, 128, 8
    $region9: #{tpu_custom_call.1} parent=1 // pred_fallthru
      _
    // Predicated region
    $region10: #{tpu_custom_call.1} parent=1 // pred_check
      _
    $region11: #{tpu_custom_call.1} parent=1 // pred_check_branch
      %37 = sbr.rel (0) target = $region13
    $region12: #{tpu_custom_call.1} parent=1 // pred_region
      %s39 = ssub.s32 2048, 2048
      %40 = vsyncadd [#allocation6], %s39
      %s41 = sshll.u32 [#allocation7], 4
      %s42 = int_to_ptr.vmem [resolvable:$true] %s41
      %47 = dma.hbm_to_vmem [thread:$0]  %s2, 2048, %s42, [#allocation6], 64, 64, 4
    $region13: #{tpu_custom_call.1} parent=1 // pred_fallthru
      _
    // Predicated region
    $region14: #{tpu_custom_call.1} parent=1 // pred_check
      _
    $region15: #{tpu_custom_call.1} parent=1 // pred_check_branch
      %49 = sbr.rel (0) target = $region17
    $region16: #{tpu_custom_call.1} parent=1 // pred_region
      _
    $region17: #{tpu_custom_call.1} parent=1 // pred_fallthru
      _
    // Predicated region
    $region18: #{tpu_custom_call.1} parent=1 // pred_check
      _
    $region19: #{tpu_custom_call.1} parent=1 // pred_check_branch
      %51 = sbr.rel (0) target = $region21
    $region20: #{tpu_custom_call.1} parent=1 // pred_region
      %52 = dma.done [#allocation3], 1024
    $region21: #{tpu_custom_call.1} parent=1 // pred_fallthru
      _
    // Predicated region
    $region22: #{tpu_custom_call.1} parent=1 // pred_check
      _
    $region23: #{tpu_custom_call.1} parent=1 // pred_check_branch
      %54 = sbr.rel (0) target = $region25
    $region24: #{tpu_custom_call.1} parent=1 // pred_region
      %55 = dma.done [#allocation6], 2048
    $region25: #{tpu_custom_call.1} parent=1 // pred_fallthru
      _
    // Predicated region
    $region26: #{tpu_custom_call.1} parent=1 // pred_check
      _
    $region27: #{tpu_custom_call.1} parent=1 // pred_check_branch
      %57 = sbr.rel (0) target = $region29
    $region28: #{tpu_custom_call.1} parent=1 // pred_region
      %58 = dma.done [#allocation6], 2048
    $region29: #{tpu_custom_call.1} parent=1 // pred_fallthru
      _
    %v60 = vld [vmem:[#allocation2] sm:$0xf]
    %v61 = vld [vmem:[#allocation2 + $0x4] sm:$0xf]
    %v62 = vld [vmem:[#allocation2 + $0x8] sm:$0xf]
    %v63 = vld [vmem:[#allocation2 + $0xc] sm:$0xf]
    %v64 = vld [vmem:[#allocation2 + $0x10] sm:$0xf]
    %v65 = vld [vmem:[#allocation2 + $0x14] sm:$0xf]
    %v66 = vld [vmem:[#allocation2 + $0x18] sm:$0xf]
    %v67 = vld [vmem:[#allocation2 + $0x1c] sm:$0xf]
    %v68 = vld [vmem:[#allocation2 + $0x20] sm:$0xf]
    %v69 = vld [vmem:[#allocation2 + $0x24] sm:$0xf]
    %v70 = vld [vmem:[#allocation2 + $0x28] sm:$0xf]
    %v71 = vld [vmem:[#allocation2 + $0x2c] sm:$0xf]
    %v72 = vld [vmem:[#allocation2 + $0x30] sm:$0xf]
    %v73 = vld [vmem:[#allocation2 + $0x34] sm:$0xf]
    %v74 = vld [vmem:[#allocation2 + $0x38] sm:$0xf]
    %v75 = vld [vmem:[#allocation2 + $0x3c] sm:$0xf]
    %v76 = vld [vmem:[#allocation5] sm:$0xff]
    %v77 = vld [vmem:[#allocation5 + $0x8] sm:$0xff]
    %v78 = vld [vmem:[#allocation5 + $0x10] sm:$0xff]
    %v79 = vld [vmem:[#allocation5 + $0x18] sm:$0xff]
    %v80 = vld [vmem:[#allocation5 + $0x20] sm:$0xff]
    %v81 = vld [vmem:[#allocation5 + $0x28] sm:$0xff]
    %v82 = vld [vmem:[#allocation5 + $0x30] sm:$0xff]
    %v83 = vld [vmem:[#allocation5 + $0x38] sm:$0xff]
    %v84 = vld [vmem:[#allocation5 + $0x40] sm:$0xff]
    %v85 = vld [vmem:[#allocation5 + $0x48] sm:$0xff]
    %v86 = vld [vmem:[#allocation5 + $0x50] sm:$0xff]
    %v87 = vld [vmem:[#allocation5 + $0x58] sm:$0xff]
    %v88 = vld [vmem:[#allocation5 + $0x60] sm:$0xff]
    %v89 = vld [vmem:[#allocation5 + $0x68] sm:$0xff]
    %v90 = vld [vmem:[#allocation5 + $0x70] sm:$0xff]
    %v91 = vld [vmem:[#allocation5 + $0x78] sm:$0xff]
    %v92 = vpack.c.bf16 %v77, %v76
    %v93 = vpack.c.bf16 %v79, %v78
    %v94 = vpack.c.bf16 %v81, %v80
    %v95 = vpack.c.bf16 %v83, %v82
    %v96 = vpack.c.bf16 %v85, %v84
    %v97 = vpack.c.bf16 %v87, %v86
    %v98 = vpack.c.bf16 %v89, %v88
    %v99 = vpack.c.bf16 %v91, %v90
    %v100 = vld [vmem:[#allocation7] sm:$0xf]
    %v101 = vld [vmem:[#allocation7 + $0x4] sm:$0xf]
    %v102 = vld [vmem:[#allocation7 + $0x8] sm:$0xf]
    %v103 = vld [vmem:[#allocation7 + $0xc] sm:$0xf]
    %v104 = vld [vmem:[#allocation7 + $0x10] sm:$0xf]
    %v105 = vld [vmem:[#allocation7 + $0x14] sm:$0xf]
    %v106 = vld [vmem:[#allocation7 + $0x18] sm:$0xf]
    %v107 = vld [vmem:[#allocation7 + $0x1c] sm:$0xf]
    %v108 = vld [vmem:[#allocation7 + $0x20] sm:$0xf]
    %v109 = vld [vmem:[#allocation7 + $0x24] sm:$0xf]
    %v110 = vld [vmem:[#allocation7 + $0x28] sm:$0xf]
    %v111 = vld [vmem:[#allocation7 + $0x2c] sm:$0xf]
    %v112 = vld [vmem:[#allocation7 + $0x30] sm:$0xf]
    %v113 = vld [vmem:[#allocation7 + $0x34] sm:$0xf]
    %v114 = vld [vmem:[#allocation7 + $0x38] sm:$0xf]
    %v115 = vld [vmem:[#allocation7 + $0x3c] sm:$0xf]
    %v132 = vunpack.c.l.b16 %v100
    %v133 = vunpack.c.l.b16 %v101
    %v134 = vunpack.c.l.b16 %v102
    %v135 = vunpack.c.l.b16 %v103
    %v136 = vunpack.c.l.b16 %v104
    %v137 = vunpack.c.l.b16 %v105
    %v138 = vunpack.c.l.b16 %v106
    %v139 = vunpack.c.l.b16 %v107
    %v140 = vunpack.c.l.b16 %v108
    %v141 = vunpack.c.l.b16 %v109
    %v142 = vunpack.c.l.b16 %v110
    %v143 = vunpack.c.l.b16 %v111
    %v144 = vunpack.c.l.b16 %v112
    %v145 = vunpack.c.l.b16 %v113
    %v146 = vunpack.c.l.b16 %v114
    %v147 = vunpack.c.l.b16 %v115
    %v148 = vpack.c.b16 %v133, %v132
    %v149 = vpack.c.b16 %v135, %v134
    %v150 = vpack.c.b16 %v137, %v136
    %v151 = vpack.c.b16 %v139, %v138
    %v152 = vpack.c.b16 %v141, %v140
    %v153 = vpack.c.b16 %v143, %v142
    %v154 = vpack.c.b16 %v145, %v144
    %v155 = vpack.c.b16 %v147, %v146
    %164 = vmatprep.subr.bf16.mxu0 0
    %165 = vmatpush1.bf16.msra.mxu0 %v148
    %166 = vmatprep.subr.bf16.mxu0 0
    %167 = vmatpush1.bf16.msra.mxu0 %v149
    %168 = vmatprep.subr.bf16.mxu0 0
    %169 = vmatpush1.bf16.msra.mxu0 %v150
    %170 = vmatprep.subr.bf16.mxu0 0
    %171 = vmatpush1.bf16.msra.mxu0 %v151
    %172 = vmatprep.subr.bf16.mxu0 0
    %173 = vmatpush1.bf16.msra.mxu0 %v152
    %174 = vmatprep.subr.bf16.mxu0 0
    %175 = vmatpush1.bf16.msra.mxu0 %v153
    %176 = vmatprep.subr.bf16.mxu0 0
    %177 = vmatpush1.bf16.msra.mxu0 %v154
    %178 = vmatprep.subr.bf16.mxu0 0
    %179 = vmatpush1.bf16.msra.mxu0 %v155
    %180 = vmatprep.subr.bf16.mxu0 0
    %181 = vmatpush1.bf16.msra.mxu0 0
    %182 = vmatprep.subr.bf16.mxu0 0
    %183 = vmatpush1.bf16.msra.mxu0 0
    %184 = vmatprep.subr.bf16.mxu0 0
    %185 = vmatpush1.bf16.msra.mxu0 0
    %186 = vmatprep.subr.bf16.mxu0 0
    %187 = vmatpush1.bf16.msra.mxu0 0
    %188 = vmatprep.subr.bf16.mxu0 0
    %189 = vmatpush1.bf16.msra.mxu0 0
    %190 = vmatprep.subr.bf16.mxu0 0
    %191 = vmatpush1.bf16.msra.mxu0 0
    %192 = vmatprep.subr.bf16.mxu0 0
    %193 = vmatpush1.bf16.msra.mxu0 0
    %194 = vmatprep.subr.bf16.mxu0 0
    %195 = vmatpush1.bf16.msra.mxu0 0
    %196 = vmatprep.mubr.bf16.mxu0 0
    %197 = vmatmul.mubr.bf16.gmra.mrb[0].mxu0 %v92
    %v198 = vpop.f32.mrb[0].mxu0
    %v199 = vadd.f32 0.0, %v198
    %v200 = vpop.f32.mrb[0].mxu0
    %v201 = vpop.f32.mrb[0].mxu0
    %v202 = vadd.f32 0.0, %v201
    %v203 = vpop.f32.mrb[0].mxu0
    %204 = vmatprep.mubr.bf16.mxu0 0
    %205 = vmatmul.mubr.bf16.gmra.mrb[0].mxu0 %v93
    %v206 = vpop.f32.mrb[0].mxu0
    %v207 = vadd.f32 0.0, %v206
    %v208 = vpop.f32.mrb[0].mxu0
    %v209 = vpop.f32.mrb[0].mxu0
    %v210 = vadd.f32 0.0, %v209
    %v211 = vpop.f32.mrb[0].mxu0
    %212 = vmatprep.mubr.bf16.mxu0 0
    %213 = vmatmul.mubr.bf16.gmra.mrb[0].mxu0 %v94
    %v214 = vpop.f32.mrb[0].mxu0
    %v215 = vadd.f32 0.0, %v214
    %v216 = vpop.f32.mrb[0].mxu0
    %v217 = vpop.f32.mrb[0].mxu0
    %v218 = vadd.f32 0.0, %v217
    %v219 = vpop.f32.mrb[0].mxu0
    %220 = vmatprep.mubr.bf16.mxu0 0
    %221 = vmatmul.mubr.bf16.gmra.mrb[0].mxu0 %v95
    %v222 = vpop.f32.mrb[0].mxu0
    %v223 = vadd.f32 0.0, %v222
    %v224 = vpop.f32.mrb[0].mxu0
    %v225 = vpop.f32.mrb[0].mxu0
    %v226 = vadd.f32 0.0, %v225
    %v227 = vpop.f32.mrb[0].mxu0
    %228 = vmatprep.mubr.bf16.mxu0 0
    %229 = vmatmul.mubr.bf16.gmra.mrb[0].mxu0 %v96
    %v230 = vpop.f32.mrb[0].mxu0
    %v231 = vadd.f32 0.0, %v230
    %v232 = vpop.f32.mrb[0].mxu0
    %v233 = vpop.f32.mrb[0].mxu0
    %v234 = vadd.f32 0.0, %v233
    %v235 = vpop.f32.mrb[0].mxu0
    %236 = vmatprep.mubr.bf16.mxu0 0
    %237 = vmatmul.mubr.bf16.gmra.mrb[0].mxu0 %v97
    %v238 = vpop.f32.mrb[0].mxu0
    %v239 = vadd.f32 0.0, %v238
    %v240 = vpop.f32.mrb[0].mxu0
    %v241 = vpop.f32.mrb[0].mxu0
    %v242 = vadd.f32 0.0, %v241
    %v243 = vpop.f32.mrb[0].mxu0
    %244 = vmatprep.mubr.bf16.mxu0 0
    %245 = vmatmul.mubr.bf16.gmra.mrb[0].mxu0 %v98
    %v246 = vpop.f32.mrb[0].mxu0
    %v247 = vadd.f32 0.0, %v246
    %v248 = vpop.f32.mrb[0].mxu0
    %v249 = vpop.f32.mrb[0].mxu0
    %v250 = vadd.f32 0.0, %v249
    %v251 = vpop.f32.mrb[0].mxu0
    %252 = vmatprep.mubr.bf16.mxu0 0
    %253 = vmatmul.mubr.bf16.gmra.mrb[0].mxu0 %v99
    %v254 = vpop.f32.mrb[0].mxu0
    %v255 = vadd.f32 0.0, %v254
    %v256 = vpop.f32.mrb[0].mxu0
    %v257 = vpop.f32.mrb[0].mxu0
    %v258 = vadd.f32 0.0, %v257
    %v259 = vpop.f32.mrb[0].mxu0
    %260 = vdwg.mxu0
    %v261 = vpack.c.bf16 %v202, %v199
    %v262 = vpack.c.bf16 %v210, %v207
    %v263 = vpack.c.bf16 %v218, %v215
    %v264 = vpack.c.bf16 %v226, %v223
    %v265 = vpack.c.bf16 %v234, %v231
    %v266 = vpack.c.bf16 %v242, %v239
    %v267 = vpack.c.bf16 %v250, %v247
    %v268 = vpack.c.bf16 %v258, %v255
    %v269 = vld [vmem:[%s3] sm:$0x1]
    %v271 = vlaneseq
    %v272 = vshrl.u32 %v271, 7
    %v273 = vsub.s32 0, %v272
    %v274 = vrot.slane %v269, %v273
    %v292 = vunpack.c.l.b16 %v60
    %v293 = vunpack.c.l.b16 %v61
    %v294 = vunpack.c.l.b16 %v62
    %v295 = vunpack.c.l.b16 %v63
    %v296 = vunpack.c.l.b16 %v64
    %v297 = vunpack.c.l.b16 %v65
    %v298 = vunpack.c.l.b16 %v66
    %v299 = vunpack.c.l.b16 %v67
    %v300 = vunpack.c.l.b16 %v68
    %v301 = vunpack.c.l.b16 %v69
    %v302 = vunpack.c.l.b16 %v70
    %v303 = vunpack.c.l.b16 %v71
    %v304 = vunpack.c.l.b16 %v72
    %v305 = vunpack.c.l.b16 %v73
    %v306 = vunpack.c.l.b16 %v74
    %v307 = vunpack.c.l.b16 %v75
    %v308 = vpack.c.b16 %v293, %v292
    %v309 = vpack.c.b16 %v295, %v294
    %v310 = vpack.c.b16 %v297, %v296
    %v311 = vpack.c.b16 %v299, %v298
    %v312 = vpack.c.b16 %v301, %v300
    %v313 = vpack.c.b16 %v303, %v302
    %v314 = vpack.c.b16 %v305, %v304
    %v315 = vpack.c.b16 %v307, %v306
    %324 = vmatprep.subr.bf16.mxu0 0
    %325 = vmatpush1.bf16.msra.mxu0 %v261
    %326 = vmatprep.subr.bf16.mxu0 0
    %327 = vmatpush1.bf16.msra.mxu0 %v262
    %328 = vmatprep.subr.bf16.mxu0 0
    %329 = vmatpush1.bf16.msra.mxu0 %v263
    %330 = vmatprep.subr.bf16.mxu0 0
    %331 = vmatpush1.bf16.msra.mxu0 %v264
    %332 = vmatprep.subr.bf16.mxu0 0
    %333 = vmatpush1.bf16.msra.mxu0 %v265
    %334 = vmatprep.subr.bf16.mxu0 0
    %335 = vmatpush1.bf16.msra.mxu0 %v266
    %336 = vmatprep.subr.bf16.mxu0 0
    %337 = vmatpush1.bf16.msra.mxu0 %v267
    %338 = vmatprep.subr.bf16.mxu0 0
    %339 = vmatpush1.bf16.msra.mxu0 %v268
    %340 = vmatprep.subr.bf16.mxu0 0
    %341 = vmatpush1.bf16.msra.mxu0 0
    %342 = vmatprep.subr.bf16.mxu0 0
    %343 = vmatpush1.bf16.msra.mxu0 0
    %344 = vmatprep.subr.bf16.mxu0 0
    %345 = vmatpush1.bf16.msra.mxu0 0
    %346 = vmatprep.subr.bf16.mxu0 0
    %347 = vmatpush1.bf16.msra.mxu0 0
    %348 = vmatprep.subr.bf16.mxu0 0
    %349 = vmatpush1.bf16.msra.mxu0 0
    %350 = vmatprep.subr.bf16.mxu0 0
    %351 = vmatpush1.bf16.msra.mxu0 0
    %352 = vmatprep.subr.bf16.mxu0 0
    %353 = vmatpush1.bf16.msra.mxu0 0
    %354 = vmatprep.subr.bf16.mxu0 0
    %355 = vmatpush1.bf16.msra.mxu0 0
    %356 = vmatprep.mubr.bf16.mxu0 0
    %357 = vmatmul.mubr.bf16.gmra.mrb[0].mxu0 %v308
    %v358 = vpop.f32.mrb[0].mxu0
    %v359 = vadd.f32 %v274, %v358
    %v360 = vpop.f32.mrb[0].mxu0
    %v361 = vpop.f32.mrb[0].mxu0
    %v362 = vadd.f32 %v274, %v361
    %v363 = vpop.f32.mrb[0].mxu0
    %364 = vmatprep.mubr.bf16.mxu0 0
    %365 = vmatmul.mubr.bf16.gmra.mrb[0].mxu0 %v309
    %v366 = vpop.f32.mrb[0].mxu0
    %v367 = vadd.f32 %v274, %v366
    %v368 = vpop.f32.mrb[0].mxu0
    %v369 = vpop.f32.mrb[0].mxu0
    %v370 = vadd.f32 %v274, %v369
    %v371 = vpop.f32.mrb[0].mxu0
    %372 = vmatprep.mubr.bf16.mxu0 0
    %373 = vmatmul.mubr.bf16.gmra.mrb[0].mxu0 %v310
    %v374 = vpop.f32.mrb[0].mxu0
    %v375 = vadd.f32 %v274, %v374
    %v376 = vpop.f32.mrb[0].mxu0
    %v377 = vpop.f32.mrb[0].mxu0
    %v378 = vadd.f32 %v274, %v377
    %v379 = vpop.f32.mrb[0].mxu0
    %380 = vmatprep.mubr.bf16.mxu0 0
    %381 = vmatmul.mubr.bf16.gmra.mrb[0].mxu0 %v311
    %v382 = vpop.f32.mrb[0].mxu0
    %v383 = vadd.f32 %v274, %v382
    %v384 = vpop.f32.mrb[0].mxu0
    %v385 = vpop.f32.mrb[0].mxu0
    %v386 = vadd.f32 %v274, %v385
    %v387 = vpop.f32.mrb[0].mxu0
    %388 = vmatprep.mubr.bf16.mxu0 0
    %389 = vmatmul.mubr.bf16.gmra.mrb[0].mxu0 %v312
    %v390 = vpop.f32.mrb[0].mxu0
    %v391 = vadd.f32 %v274, %v390
    %v392 = vpop.f32.mrb[0].mxu0
    %v393 = vpop.f32.mrb[0].mxu0
    %v394 = vadd.f32 %v274, %v393
    %v395 = vpop.f32.mrb[0].mxu0
    %396 = vmatprep.mubr.bf16.mxu0 0
    %397 = vmatmul.mubr.bf16.gmra.mrb[0].mxu0 %v313
    %v398 = vpop.f32.mrb[0].mxu0
    %v399 = vadd.f32 %v274, %v398
    %v400 = vpop.f32.mrb[0].mxu0
    %v401 = vpop.f32.mrb[0].mxu0
    %v402 = vadd.f32 %v274, %v401
    %v403 = vpop.f32.mrb[0].mxu0
    %404 = vmatprep.mubr.bf16.mxu0 0
    %405 = vmatmul.mubr.bf16.gmra.mrb[0].mxu0 %v314
    %v406 = vpop.f32.mrb[0].mxu0
    %v407 = vadd.f32 %v274, %v406
    %v408 = vpop.f32.mrb[0].mxu0
    %v409 = vpop.f32.mrb[0].mxu0
    %v410 = vadd.f32 %v274, %v409
    %v411 = vpop.f32.mrb[0].mxu0
    %412 = vmatprep.mubr.bf16.mxu0 0
    %413 = vmatmul.mubr.bf16.gmra.mrb[0].mxu0 %v315
    %v414 = vpop.f32.mrb[0].mxu0
    %v415 = vadd.f32 %v274, %v414
    %v416 = vpop.f32.mrb[0].mxu0
    %v417 = vpop.f32.mrb[0].mxu0
    %v418 = vadd.f32 %v274, %v417
    %v419 = vpop.f32.mrb[0].mxu0
    %420 = vdwg.mxu0
    %v421 = vmax.f32 %v359, 0.0
    %v422 = vmax.f32 %v362, 0.0
    %v423 = vmax.f32 %v367, 0.0
    %v424 = vmax.f32 %v370, 0.0
    %v425 = vmax.f32 %v375, 0.0
    %v426 = vmax.f32 %v378, 0.0
    %v427 = vmax.f32 %v383, 0.0
    %v428 = vmax.f32 %v386, 0.0
    %v429 = vmax.f32 %v391, 0.0
    %v430 = vmax.f32 %v394, 0.0
    %v431 = vmax.f32 %v399, 0.0
    %v432 = vmax.f32 %v402, 0.0
    %v433 = vmax.f32 %v407, 0.0
    %v434 = vmax.f32 %v410, 0.0
    %v435 = vmax.f32 %v415, 0.0
    %v436 = vmax.f32 %v418, 0.0
    %v437 = vmul.f32 %v421, %v421
    %v438 = vmul.f32 %v422, %v422
    %v439 = vmul.f32 %v423, %v423
    %v440 = vmul.f32 %v424, %v424
    %v441 = vmul.f32 %v425, %v425
    %v442 = vmul.f32 %v426, %v426
    %v443 = vmul.f32 %v427, %v427
    %v444 = vmul.f32 %v428, %v428
    %v445 = vmul.f32 %v429, %v429
    %v446 = vmul.f32 %v430, %v430
    %v447 = vmul.f32 %v431, %v431
    %v448 = vmul.f32 %v432, %v432
    %v449 = vmul.f32 %v433, %v433
    %v450 = vmul.f32 %v434, %v434
    %v451 = vmul.f32 %v435, %v435
    %v452 = vmul.f32 %v436, %v436
    %453 = vadd.xlane.f32.xlu0 %v437
    %v454 = vpop.xlane.xlu0 %453
    %455 = vadd.xlane.f32.xlu0 %v438
    %v456 = vpop.xlane.xlu0 %455
    %457 = vadd.xlane.f32.xlu0 %v439
    %v458 = vpop.xlane.xlu0 %457
    %459 = vadd.xlane.f32.xlu0 %v440
    %v460 = vpop.xlane.xlu0 %459
    %461 = vadd.xlane.f32.xlu0 %v441
    %v462 = vpop.xlane.xlu0 %461
    %463 = vadd.xlane.f32.xlu0 %v442
    %v464 = vpop.xlane.xlu0 %463
    %465 = vadd.xlane.f32.xlu0 %v443
    %v466 = vpop.xlane.xlu0 %465
    %467 = vadd.xlane.f32.xlu0 %v444
    %v468 = vpop.xlane.xlu0 %467
    %469 = vadd.xlane.f32.xlu0 %v445
    %v470 = vpop.xlane.xlu0 %469
    %471 = vadd.xlane.f32.xlu0 %v446
    %v472 = vpop.xlane.xlu0 %471
    %473 = vadd.xlane.f32.xlu0 %v447
    %v474 = vpop.xlane.xlu0 %473
    %475 = vadd.xlane.f32.xlu0 %v448
    %v476 = vpop.xlane.xlu0 %475
    %477 = vadd.xlane.f32.xlu0 %v449
    %v478 = vpop.xlane.xlu0 %477
    %479 = vadd.xlane.f32.xlu0 %v450
    %v480 = vpop.xlane.xlu0 %479
    %481 = vadd.xlane.f32.xlu0 %v451
    %v482 = vpop.xlane.xlu0 %481
    %483 = vadd.xlane.f32.xlu0 %v452
    %v484 = vpop.xlane.xlu0 %483
    %v485 = vmax.f32 %v454, 1e-24
    %v486 = vmax.f32 %v456, 1e-24
    %v487 = vmax.f32 %v458, 1e-24
    %v488 = vmax.f32 %v460, 1e-24
    %v489 = vmax.f32 %v462, 1e-24
    %v490 = vmax.f32 %v464, 1e-24
    %v491 = vmax.f32 %v466, 1e-24
    %v492 = vmax.f32 %v468, 1e-24
    %v493 = vmax.f32 %v470, 1e-24
    %v494 = vmax.f32 %v472, 1e-24
    %v495 = vmax.f32 %v474, 1e-24
    %v496 = vmax.f32 %v476, 1e-24
    %v497 = vmax.f32 %v478, 1e-24
    %v498 = vmax.f32 %v480, 1e-24
    %v499 = vmax.f32 %v482, 1e-24
    %v500 = vmax.f32 %v484, 1e-24
    %v501 = vrsqrt.pop %v485
    %v502 = vrsqrt.pop %v486
    %v503 = vrsqrt.pop %v487
    %v504 = vrsqrt.pop %v488
    %v505 = vrsqrt.pop %v489
    %v506 = vrsqrt.pop %v490
    %v507 = vrsqrt.pop %v491
    %v508 = vrsqrt.pop %v492
    %v509 = vrsqrt.pop %v493
    %v510 = vrsqrt.pop %v494
    %v511 = vrsqrt.pop %v495
    %v512 = vrsqrt.pop %v496
    %v513 = vrsqrt.pop %v497
    %v514 = vrsqrt.pop %v498
    %v515 = vrsqrt.pop %v499
    %v516 = vrsqrt.pop %v500
    %v517 = vmul.f32 %v421, %v501
    %v518 = vmul.f32 %v422, %v502
    %v519 = vmul.f32 %v423, %v503
    %v520 = vmul.f32 %v424, %v504
    %v521 = vmul.f32 %v425, %v505
    %v522 = vmul.f32 %v426, %v506
    %v523 = vmul.f32 %v427, %v507
    %v524 = vmul.f32 %v428, %v508
    %v525 = vmul.f32 %v429, %v509
    %v526 = vmul.f32 %v430, %v510
    %v527 = vmul.f32 %v431, %v511
    %v528 = vmul.f32 %v432, %v512
    %v529 = vmul.f32 %v433, %v513
    %v530 = vmul.f32 %v434, %v514
    %v531 = vmul.f32 %v435, %v515
    %v532 = vmul.f32 %v436, %v516
    %v533 = vpack.c.bf16 %v518, %v517
    %v534 = vpack.c.bf16 %v520, %v519
    %v535 = vpack.c.bf16 %v522, %v521
    %v536 = vpack.c.bf16 %v524, %v523
    %v537 = vpack.c.bf16 %v526, %v525
    %v538 = vpack.c.bf16 %v528, %v527
    %v539 = vpack.c.bf16 %v530, %v529
    %v540 = vpack.c.bf16 %v532, %v531
    %s541 = scalar_lea.vmem [#allocation7], 64
    %v542 = vld [vmem:[%s541] sm:$0xf]
    %v543 = vld [vmem:[%s541 + $0x4] sm:$0xf]
    %v544 = vld [vmem:[%s541 + $0x8] sm:$0xf]
    %v545 = vld [vmem:[%s541 + $0xc] sm:$0xf]
    %v546 = vld [vmem:[%s541 + $0x10] sm:$0xf]
    %v547 = vld [vmem:[%s541 + $0x14] sm:$0xf]
    %v548 = vld [vmem:[%s541 + $0x18] sm:$0xf]
    %v549 = vld [vmem:[%s541 + $0x1c] sm:$0xf]
    %v550 = vld [vmem:[%s541 + $0x20] sm:$0xf]
    %v551 = vld [vmem:[%s541 + $0x24] sm:$0xf]
    %v552 = vld [vmem:[%s541 + $0x28] sm:$0xf]
    %v553 = vld [vmem:[%s541 + $0x2c] sm:$0xf]
    %v554 = vld [vmem:[%s541 + $0x30] sm:$0xf]
    %v555 = vld [vmem:[%s541 + $0x34] sm:$0xf]
    %v556 = vld [vmem:[%s541 + $0x38] sm:$0xf]
    %v557 = vld [vmem:[%s541 + $0x3c] sm:$0xf]
    %v574 = vunpack.c.l.b16 %v542
    %v575 = vunpack.c.l.b16 %v543
    %v576 = vunpack.c.l.b16 %v544
    %v577 = vunpack.c.l.b16 %v545
    %v578 = vunpack.c.l.b16 %v546
    %v579 = vunpack.c.l.b16 %v547
    %v580 = vunpack.c.l.b16 %v548
    %v581 = vunpack.c.l.b16 %v549
    %v582 = vunpack.c.l.b16 %v550
    %v583 = vunpack.c.l.b16 %v551
    %v584 = vunpack.c.l.b16 %v552
    %v585 = vunpack.c.l.b16 %v553
    %v586 = vunpack.c.l.b16 %v554
    %v587 = vunpack.c.l.b16 %v555
    %v588 = vunpack.c.l.b16 %v556
    %v589 = vunpack.c.l.b16 %v557
    %v590 = vpack.c.b16 %v575, %v574
    %v591 = vpack.c.b16 %v577, %v576
    %v592 = vpack.c.b16 %v579, %v578
    %v593 = vpack.c.b16 %v581, %v580
    %v594 = vpack.c.b16 %v583, %v582
    %v595 = vpack.c.b16 %v585, %v584
    %v596 = vpack.c.b16 %v587, %v586
    %v597 = vpack.c.b16 %v589, %v588
    %606 = vmatprep.subr.bf16.mxu0 0
    %607 = vmatpush1.bf16.msra.mxu0 %v590
    %608 = vmatprep.subr.bf16.mxu0 0
    %609 = vmatpush1.bf16.msra.mxu0 %v591
    %610 = vmatprep.subr.bf16.mxu0 0
    %611 = vmatpush1.bf16.msra.mxu0 %v592
    %612 = vmatprep.subr.bf16.mxu0 0
    %613 = vmatpush1.bf16.msra.mxu0 %v593
    %614 = vmatprep.subr.bf16.mxu0 0
    %615 = vmatpush1.bf16.msra.mxu0 %v594
    %616 = vmatprep.subr.bf16.mxu0 0
    %617 = vmatpush1.bf16.msra.mxu0 %v595
    %618 = vmatprep.subr.bf16.mxu0 0
    %619 = vmatpush1.bf16.msra.mxu0 %v596
    %620 = vmatprep.subr.bf16.mxu0 0
    %621 = vmatpush1.bf16.msra.mxu0 %v597
    %622 = vmatprep.subr.bf16.mxu0 0
    %623 = vmatpush1.bf16.msra.mxu0 0
    %624 = vmatprep.subr.bf16.mxu0 0
    %625 = vmatpush1.bf16.msra.mxu0 0
    %626 = vmatprep.subr.bf16.mxu0 0
    %627 = vmatpush1.bf16.msra.mxu0 0
    %628 = vmatprep.subr.bf16.mxu0 0
    %629 = vmatpush1.bf16.msra.mxu0 0
    %630 = vmatprep.subr.bf16.mxu0 0
    %631 = vmatpush1.bf16.msra.mxu0 0
    %632 = vmatprep.subr.bf16.mxu0 0
    %633 = vmatpush1.bf16.msra.mxu0 0
    %634 = vmatprep.subr.bf16.mxu0 0
    %635 = vmatpush1.bf16.msra.mxu0 0
    %636 = vmatprep.subr.bf16.mxu0 0
    %637 = vmatpush1.bf16.msra.mxu0 0
    %638 = vmatprep.mubr.bf16.mxu0 0
    %639 = vmatmul.mubr.bf16.gmra.mrb[0].mxu0 %v533
    %v640 = vpop.f32.mrb[0].mxu0
    %v641 = vadd.f32 0.0, %v640
    %v642 = vpop.f32.mrb[0].mxu0
    %v643 = vpop.f32.mrb[0].mxu0
    %v644 = vadd.f32 0.0, %v643
    %v645 = vpop.f32.mrb[0].mxu0
    %646 = vmatprep.mubr.bf16.mxu0 0
    %647 = vmatmul.mubr.bf16.gmra.mrb[0].mxu0 %v534
    %v648 = vpop.f32.mrb[0].mxu0
    %v649 = vadd.f32 0.0, %v648
    %v650 = vpop.f32.mrb[0].mxu0
    %v651 = vpop.f32.mrb[0].mxu0
    %v652 = vadd.f32 0.0, %v651
    %v653 = vpop.f32.mrb[0].mxu0
    %654 = vmatprep.mubr.bf16.mxu0 0
    %655 = vmatmul.mubr.bf16.gmra.mrb[0].mxu0 %v535
    %v656 = vpop.f32.mrb[0].mxu0
    %v657 = vadd.f32 0.0, %v656
    %v658 = vpop.f32.mrb[0].mxu0
    %v659 = vpop.f32.mrb[0].mxu0
    %v660 = vadd.f32 0.0, %v659
    %v661 = vpop.f32.mrb[0].mxu0
    %662 = vmatprep.mubr.bf16.mxu0 0
    %663 = vmatmul.mubr.bf16.gmra.mrb[0].mxu0 %v536
    %v664 = vpop.f32.mrb[0].mxu0
    %v665 = vadd.f32 0.0, %v664
    %v666 = vpop.f32.mrb[0].mxu0
    %v667 = vpop.f32.mrb[0].mxu0
    %v668 = vadd.f32 0.0, %v667
    %v669 = vpop.f32.mrb[0].mxu0
    %670 = vmatprep.mubr.bf16.mxu0 0
    %671 = vmatmul.mubr.bf16.gmra.mrb[0].mxu0 %v537
    %v672 = vpop.f32.mrb[0].mxu0
    %v673 = vadd.f32 0.0, %v672
    %v674 = vpop.f32.mrb[0].mxu0
    %v675 = vpop.f32.mrb[0].mxu0
    %v676 = vadd.f32 0.0, %v675
    %v677 = vpop.f32.mrb[0].mxu0
    %678 = vmatprep.mubr.bf16.mxu0 0
    %679 = vmatmul.mubr.bf16.gmra.mrb[0].mxu0 %v538
    %v680 = vpop.f32.mrb[0].mxu0
    %v681 = vadd.f32 0.0, %v680
    %v682 = vpop.f32.mrb[0].mxu0
    %v683 = vpop.f32.mrb[0].mxu0
    %v684 = vadd.f32 0.0, %v683
    %v685 = vpop.f32.mrb[0].mxu0
    %686 = vmatprep.mubr.bf16.mxu0 0
    %687 = vmatmul.mubr.bf16.gmra.mrb[0].mxu0 %v539
    %v688 = vpop.f32.mrb[0].mxu0
    %v689 = vadd.f32 0.0, %v688
    %v690 = vpop.f32.mrb[0].mxu0
    %v691 = vpop.f32.mrb[0].mxu0
    %v692 = vadd.f32 0.0, %v691
    %v693 = vpop.f32.mrb[0].mxu0
    %694 = vmatprep.mubr.bf16.mxu0 0
    %695 = vmatmul.mubr.bf16.gmra.mrb[0].mxu0 %v540
    %v696 = vpop.f32.mrb[0].mxu0
    %v697 = vadd.f32 0.0, %v696
    %v698 = vpop.f32.mrb[0].mxu0
    %v699 = vpop.f32.mrb[0].mxu0
    %v700 = vadd.f32 0.0, %v699
    %v701 = vpop.f32.mrb[0].mxu0
    %702 = vdwg.mxu0
    %v703 = vpack.c.bf16 %v644, %v641
    %v704 = vpack.c.bf16 %v652, %v649
    %v705 = vpack.c.bf16 %v660, %v657
    %v706 = vpack.c.bf16 %v668, %v665
    %v707 = vpack.c.bf16 %v676, %v673
    %v708 = vpack.c.bf16 %v684, %v681
    %v709 = vpack.c.bf16 %v692, %v689
    %v710 = vpack.c.bf16 %v700, %v697
    %s711 = scalar_lea.vmem %s3, 1
    %v712 = vld [vmem:[%s711] sm:$0x1]
    %v714 = vlaneseq
    %v715 = vshrl.u32 %v714, 7
    %v716 = vsub.s32 0, %v715
    %v717 = vrot.slane %v712, %v716
    %719 = vmatprep.subr.bf16.mxu0 0
    %720 = vmatpush1.bf16.msra.mxu0 %v703
    %721 = vmatprep.subr.bf16.mxu0 0
    %722 = vmatpush1.bf16.msra.mxu0 %v704
    %723 = vmatprep.subr.bf16.mxu0 0
    %724 = vmatpush1.bf16.msra.mxu0 %v705
    %725 = vmatprep.subr.bf16.mxu0 0
    %726 = vmatpush1.bf16.msra.mxu0 %v706
    %727 = vmatprep.subr.bf16.mxu0 0
    %728 = vmatpush1.bf16.msra.mxu0 %v707
    %729 = vmatprep.subr.bf16.mxu0 0
    %730 = vmatpush1.bf16.msra.mxu0 %v708
    %731 = vmatprep.subr.bf16.mxu0 0
    %732 = vmatpush1.bf16.msra.mxu0 %v709
    %733 = vmatprep.subr.bf16.mxu0 0
    %734 = vmatpush1.bf16.msra.mxu0 %v710
    %735 = vmatprep.subr.bf16.mxu0 0
    %736 = vmatpush1.bf16.msra.mxu0 0
    %737 = vmatprep.subr.bf16.mxu0 0
    %738 = vmatpush1.bf16.msra.mxu0 0
    %739 = vmatprep.subr.bf16.mxu0 0
    %740 = vmatpush1.bf16.msra.mxu0 0
    %741 = vmatprep.subr.bf16.mxu0 0
    %742 = vmatpush1.bf16.msra.mxu0 0
    %743 = vmatprep.subr.bf16.mxu0 0
    %744 = vmatpush1.bf16.msra.mxu0 0
    %745 = vmatprep.subr.bf16.mxu0 0
    %746 = vmatpush1.bf16.msra.mxu0 0
    %747 = vmatprep.subr.bf16.mxu0 0
    %748 = vmatpush1.bf16.msra.mxu0 0
    %749 = vmatprep.subr.bf16.mxu0 0
    %750 = vmatpush1.bf16.msra.mxu0 0
    %751 = vmatprep.mubr.bf16.mxu0 0
    %752 = vmatmul.mubr.bf16.gmra.mrb[0].mxu0 %v308
    %v753 = vpop.f32.mrb[0].mxu0
    %v754 = vadd.f32 %v717, %v753
    %v755 = vpop.f32.mrb[0].mxu0
    %v756 = vpop.f32.mrb[0].mxu0
    %v757 = vadd.f32 %v717, %v756
    %v758 = vpop.f32.mrb[0].mxu0
    %759 = vmatprep.mubr.bf16.mxu0 0
    %760 = vmatmul.mubr.bf16.gmra.mrb[0].mxu0 %v309
    %v761 = vpop.f32.mrb[0].mxu0
    %v762 = vadd.f32 %v717, %v761
    %v763 = vpop.f32.mrb[0].mxu0
    %v764 = vpop.f32.mrb[0].mxu0
    %v765 = vadd.f32 %v717, %v764
    %v766 = vpop.f32.mrb[0].mxu0
    %767 = vmatprep.mubr.bf16.mxu0 0
    %768 = vmatmul.mubr.bf16.gmra.mrb[0].mxu0 %v310
    %v769 = vpop.f32.mrb[0].mxu0
    %v770 = vadd.f32 %v717, %v769
    %v771 = vpop.f32.mrb[0].mxu0
    %v772 = vpop.f32.mrb[0].mxu0
    %v773 = vadd.f32 %v717, %v772
    %v774 = vpop.f32.mrb[0].mxu0
    %775 = vmatprep.mubr.bf16.mxu0 0
    %776 = vmatmul.mubr.bf16.gmra.mrb[0].mxu0 %v311
    %v777 = vpop.f32.mrb[0].mxu0
    %v778 = vadd.f32 %v717, %v777
    %v779 = vpop.f32.mrb[0].mxu0
    %v780 = vpop.f32.mrb[0].mxu0
    %v781 = vadd.f32 %v717, %v780
    %v782 = vpop.f32.mrb[0].mxu0
    %783 = vmatprep.mubr.bf16.mxu0 0
    %784 = vmatmul.mubr.bf16.gmra.mrb[0].mxu0 %v312
    %v785 = vpop.f32.mrb[0].mxu0
    %v786 = vadd.f32 %v717, %v785
    %v787 = vpop.f32.mrb[0].mxu0
    %v788 = vpop.f32.mrb[0].mxu0
    %v789 = vadd.f32 %v717, %v788
    %v790 = vpop.f32.mrb[0].mxu0
    %791 = vmatprep.mubr.bf16.mxu0 0
    %792 = vmatmul.mubr.bf16.gmra.mrb[0].mxu0 %v313
    %v793 = vpop.f32.mrb[0].mxu0
    %v794 = vadd.f32 %v717, %v793
    %v795 = vpop.f32.mrb[0].mxu0
    %v796 = vpop.f32.mrb[0].mxu0
    %v797 = vadd.f32 %v717, %v796
    %v798 = vpop.f32.mrb[0].mxu0
    %799 = vmatprep.mubr.bf16.mxu0 0
    %800 = vmatmul.mubr.bf16.gmra.mrb[0].mxu0 %v314
    %v801 = vpop.f32.mrb[0].mxu0
    %v802 = vadd.f32 %v717, %v801
    %v803 = vpop.f32.mrb[0].mxu0
    %v804 = vpop.f32.mrb[0].mxu0
    %v805 = vadd.f32 %v717, %v804
    %v806 = vpop.f32.mrb[0].mxu0
    %807 = vmatprep.mubr.bf16.mxu0 0
    %808 = vmatmul.mubr.bf16.gmra.mrb[0].mxu0 %v315
    %v809 = vpop.f32.mrb[0].mxu0
    %v810 = vadd.f32 %v717, %v809
    %v811 = vpop.f32.mrb[0].mxu0
    %v812 = vpop.f32.mrb[0].mxu0
    %v813 = vadd.f32 %v717, %v812
    %v814 = vpop.f32.mrb[0].mxu0
    %815 = vdwg.mxu0
    %v816 = vmax.f32 %v754, 0.0
    %v817 = vmax.f32 %v757, 0.0
    %v818 = vmax.f32 %v762, 0.0
    %v819 = vmax.f32 %v765, 0.0
    %v820 = vmax.f32 %v770, 0.0
    %v821 = vmax.f32 %v773, 0.0
    %v822 = vmax.f32 %v778, 0.0
    %v823 = vmax.f32 %v781, 0.0
    %v824 = vmax.f32 %v786, 0.0
    %v825 = vmax.f32 %v789, 0.0
    %v826 = vmax.f32 %v794, 0.0
    %v827 = vmax.f32 %v797, 0.0
    %v828 = vmax.f32 %v802, 0.0
    %v829 = vmax.f32 %v805, 0.0
    %v830 = vmax.f32 %v810, 0.0
    %v831 = vmax.f32 %v813, 0.0
    %v832 = vmul.f32 %v816, %v816
    %v833 = vmul.f32 %v817, %v817
    %v834 = vmul.f32 %v818, %v818
    %v835 = vmul.f32 %v819, %v819
    %v836 = vmul.f32 %v820, %v820
    %v837 = vmul.f32 %v821, %v821
    %v838 = vmul.f32 %v822, %v822
    %v839 = vmul.f32 %v823, %v823
    %v840 = vmul.f32 %v824, %v824
    %v841 = vmul.f32 %v825, %v825
    %v842 = vmul.f32 %v826, %v826
    %v843 = vmul.f32 %v827, %v827
    %v844 = vmul.f32 %v828, %v828
    %v845 = vmul.f32 %v829, %v829
    %v846 = vmul.f32 %v830, %v830
    %v847 = vmul.f32 %v831, %v831
    %848 = vadd.xlane.f32.xlu0 %v832
    %v849 = vpop.xlane.xlu0 %848
    %850 = vadd.xlane.f32.xlu0 %v833
    %v851 = vpop.xlane.xlu0 %850
    %852 = vadd.xlane.f32.xlu0 %v834
    %v853 = vpop.xlane.xlu0 %852
    %854 = vadd.xlane.f32.xlu0 %v835
    %v855 = vpop.xlane.xlu0 %854
    %856 = vadd.xlane.f32.xlu0 %v836
    %v857 = vpop.xlane.xlu0 %856
    %858 = vadd.xlane.f32.xlu0 %v837
    %v859 = vpop.xlane.xlu0 %858
    %860 = vadd.xlane.f32.xlu0 %v838
    %v861 = vpop.xlane.xlu0 %860
    %862 = vadd.xlane.f32.xlu0 %v839
    %v863 = vpop.xlane.xlu0 %862
    %864 = vadd.xlane.f32.xlu0 %v840
    %v865 = vpop.xlane.xlu0 %864
    %866 = vadd.xlane.f32.xlu0 %v841
    %v867 = vpop.xlane.xlu0 %866
    %868 = vadd.xlane.f32.xlu0 %v842
    %v869 = vpop.xlane.xlu0 %868
    %870 = vadd.xlane.f32.xlu0 %v843
    %v871 = vpop.xlane.xlu0 %870
    %872 = vadd.xlane.f32.xlu0 %v844
    %v873 = vpop.xlane.xlu0 %872
    %874 = vadd.xlane.f32.xlu0 %v845
    %v875 = vpop.xlane.xlu0 %874
    %876 = vadd.xlane.f32.xlu0 %v846
    %v877 = vpop.xlane.xlu0 %876
    %878 = vadd.xlane.f32.xlu0 %v847
    %v879 = vpop.xlane.xlu0 %878
    %v880 = vmax.f32 %v849, 1e-24
    %v881 = vmax.f32 %v851, 1e-24
    %v882 = vmax.f32 %v853, 1e-24
    %v883 = vmax.f32 %v855, 1e-24
    %v884 = vmax.f32 %v857, 1e-24
    %v885 = vmax.f32 %v859, 1e-24
    %v886 = vmax.f32 %v861, 1e-24
    %v887 = vmax.f32 %v863, 1e-24
    %v888 = vmax.f32 %v865, 1e-24
    %v889 = vmax.f32 %v867, 1e-24
    %v890 = vmax.f32 %v869, 1e-24
    %v891 = vmax.f32 %v871, 1e-24
    %v892 = vmax.f32 %v873, 1e-24
    %v893 = vmax.f32 %v875, 1e-24
    %v894 = vmax.f32 %v877, 1e-24
    %v895 = vmax.f32 %v879, 1e-24
    %v896 = vrsqrt.pop %v880
    %v897 = vrsqrt.pop %v881
    %v898 = vrsqrt.pop %v882
    %v899 = vrsqrt.pop %v883
    %v900 = vrsqrt.pop %v884
    %v901 = vrsqrt.pop %v885
    %v902 = vrsqrt.pop %v886
    %v903 = vrsqrt.pop %v887
    %v904 = vrsqrt.pop %v888
    %v905 = vrsqrt.pop %v889
    %v906 = vrsqrt.pop %v890
    %v907 = vrsqrt.pop %v891
    %v908 = vrsqrt.pop %v892
    %v909 = vrsqrt.pop %v893
    %v910 = vrsqrt.pop %v894
    %v911 = vrsqrt.pop %v895
    %v912 = vmul.f32 %v816, %v896
    %v913 = vmul.f32 %v817, %v897
    %v914 = vmul.f32 %v818, %v898
    %v915 = vmul.f32 %v819, %v899
    %v916 = vmul.f32 %v820, %v900
    %v917 = vmul.f32 %v821, %v901
    %v918 = vmul.f32 %v822, %v902
    %v919 = vmul.f32 %v823, %v903
    %v920 = vmul.f32 %v824, %v904
    %v921 = vmul.f32 %v825, %v905
    %v922 = vmul.f32 %v826, %v906
    %v923 = vmul.f32 %v827, %v907
    %v924 = vmul.f32 %v828, %v908
    %v925 = vmul.f32 %v829, %v909
    %v926 = vmul.f32 %v830, %v910
    %v927 = vmul.f32 %v831, %v911
    %v928 = vadd.f32 %v912, %v76
    %v929 = vadd.f32 %v913, %v77
    %v930 = vadd.f32 %v914, %v78
    %v931 = vadd.f32 %v915, %v79
    %v932 = vadd.f32 %v916, %v80
    %v933 = vadd.f32 %v917, %v81
    %v934 = vadd.f32 %v918, %v82
    %v935 = vadd.f32 %v919, %v83
    %v936 = vadd.f32 %v920, %v84
    %v937 = vadd.f32 %v921, %v85
    %v938 = vadd.f32 %v922, %v86
    %v939 = vadd.f32 %v923, %v87
    %v940 = vadd.f32 %v924, %v88
    %v941 = vadd.f32 %v925, %v89
    %v942 = vadd.f32 %v926, %v90
    %v943 = vadd.f32 %v927, %v91
    %v944 = vmax.f32 %v928, 0.0
    %v945 = vmax.f32 %v929, 0.0
    %v946 = vmax.f32 %v930, 0.0
    %v947 = vmax.f32 %v931, 0.0
    %v948 = vmax.f32 %v932, 0.0
    %v949 = vmax.f32 %v933, 0.0
    %v950 = vmax.f32 %v934, 0.0
    %v951 = vmax.f32 %v935, 0.0
    %v952 = vmax.f32 %v936, 0.0
    %v953 = vmax.f32 %v937, 0.0
    %v954 = vmax.f32 %v938, 0.0
    %v955 = vmax.f32 %v939, 0.0
    %v956 = vmax.f32 %v940, 0.0
    %v957 = vmax.f32 %v941, 0.0
    %v958 = vmax.f32 %v942, 0.0
    %v959 = vmax.f32 %v943, 0.0
    %960 = vst [vmem:[#allocation8] sm:$0xff] %v944
    %961 = vst [vmem:[#allocation8 + $0x8] sm:$0xff] %v945
    %962 = vst [vmem:[#allocation8 + $0x10] sm:$0xff] %v946
    %963 = vst [vmem:[#allocation8 + $0x18] sm:$0xff] %v947
    %964 = vst [vmem:[#allocation8 + $0x20] sm:$0xff] %v948
    %965 = vst [vmem:[#allocation8 + $0x28] sm:$0xff] %v949
    %966 = vst [vmem:[#allocation8 + $0x30] sm:$0xff] %v950
    %967 = vst [vmem:[#allocation8 + $0x38] sm:$0xff] %v951
    %968 = vst [vmem:[#allocation8 + $0x40] sm:$0xff] %v952
    %969 = vst [vmem:[#allocation8 + $0x48] sm:$0xff] %v953
    %970 = vst [vmem:[#allocation8 + $0x50] sm:$0xff] %v954
    %971 = vst [vmem:[#allocation8 + $0x58] sm:$0xff] %v955
    %972 = vst [vmem:[#allocation8 + $0x60] sm:$0xff] %v956
    %973 = vst [vmem:[#allocation8 + $0x68] sm:$0xff] %v957
    %974 = vst [vmem:[#allocation8 + $0x70] sm:$0xff] %v958
    %975 = vst [vmem:[#allocation8 + $0x78] sm:$0xff] %v959
    // Predicated region
    $region30: #{tpu_custom_call.1} parent=1 // pred_check
      _
    $region31: #{tpu_custom_call.1} parent=1 // pred_check_branch
      %977 = sbr.rel (0) target = $region33
    $region32: #{tpu_custom_call.1} parent=1 // pred_region
      %s979 = ssub.s32 2048, 2048
      %980 = vsyncadd [#allocation4], %s979
      %s981 = sshll.u32 [#allocation8], 4
      %s982 = int_to_ptr.vmem [resolvable:$true] %s981
      %987 = dma.vmem_to_hbm [thread:$0]  %s982, 2048, %s4, [#allocation4], 128, 128, 8
    $region33: #{tpu_custom_call.1} parent=1 // pred_fallthru
      _
    // Predicated region
    $region34: #{tpu_custom_call.1} parent=1 // pred_check
      _
    $region35: #{tpu_custom_call.1} parent=1 // pred_check_branch
      %989 = sbr.rel (0) target = $region37
    $region36: #{tpu_custom_call.1} parent=1 // pred_region
      %990 = dma.done [#allocation4], 2048
    $region37: #{tpu_custom_call.1} parent=1 // pred_fallthru
      _
    %991 = vsyncpa [#allocation3], 1
    %992 = vsyncpa [#allocation6], 1
    %993 = vsyncpa [#allocation4], 1

</llo_original>
